<compile_context>
chip_gen: v7x
topology: tpu7x:2x2x1
jax: 0.10.0
libtpu: 0.0.40
codegen_flags: <defaults>
</compile_context>

<pallas_src>
import functools

import jax
import jax.numpy as jnp
from jax import lax
from jax.experimental import pallas as pl
from jax.experimental.pallas import tpu as pltpu

EPS = 1e-6
NEG_INF = -1e9


def _vmem_limit_bytes():
    # Generous scoped-VMEM budget where the chip has it (v5e/v6e: 128 MiB
    # physical) but never more than ~3/4 of physical, so v7x (64 MiB) is safe.
    try:
        cap = pltpu.get_tpu_info().vmem_capacity_bytes
        return int(min(96 * 1024 * 1024, cap * 3 // 4))
    except Exception:  # pragma: no cover - conservative fallback
        return 32 * 1024 * 1024


VMEM_LIMIT_BYTES = _vmem_limit_bytes()


def _cparams(dim_semantics):
    return pltpu.CompilerParams(dimension_semantics=dim_semantics,
                                vmem_limit_bytes=VMEM_LIMIT_BYTES)


def _tile(dim, target):
    # Demo shapes are single-tile; at production sizes pick divisors of `dim`
    # (wrappers assert exact divisibility so reduction tails are never padded).
    return dim if dim <= target else target


def _layernorm_rows(z, alpha, beta):
    # PyTorch reference LayerNormalization: unbiased std (ddof=1), divide by
    # (std + eps), scalar alpha/bias. Stats in f32; EUP reciprocal (no divide).
    d = z.shape[-1]
    mean = jnp.mean(z, axis=-1, keepdims=True)
    diff = z - mean
    var = jnp.sum(diff * diff, axis=-1, keepdims=True) * (1.0 / (d - 1))
    inv = pl.reciprocal(jnp.sqrt(var) + EPS, approx=True)
    return alpha * diff * inv + beta


# --------------------- tiled linear (fused QKV projection) ---------------------

def _linear_kernel(x_ref, w_ref, b_ref, o_ref, acc_ref):
    k = pl.program_id(2)

    @pl.when(k == 0)
    def _():
        acc_ref[...] = jnp.zeros_like(acc_ref)

    acc_ref[...] += jnp.dot(x_ref[...].astype(jnp.bfloat16), w_ref[...],
                            preferred_element_type=jnp.float32)

    @pl.when(k == pl.num_programs(2) - 1)
    def _():
        o_ref[...] = (acc_ref[...] + b_ref[...]).astype(o_ref.dtype)


def linear(x2d, w, b, *, tm=512, tn=1024, tk=512, out_dtype=jnp.bfloat16):
    # x2d: (M, K), w: (K, N) bf16, b: (1, N) f32 -> (M, N) out_dtype
    M, K = x2d.shape
    N = w.shape[1]
    tm, tn, tk = _tile(M, tm), _tile(N, tn), _tile(K, tk)
    assert M % tm == 0 and N % tn == 0 and K % tk == 0, "tiles must divide dims"
    return pl.pallas_call(
        _linear_kernel,
        out_shape=jax.ShapeDtypeStruct((M, N), out_dtype),
        grid=(M // tm, N // tn, K // tk),
        in_specs=[
            pl.BlockSpec((tm, tk), lambda i, j, k: (i, k)),
            pl.BlockSpec((tk, tn), lambda i, j, k: (k, j)),
            pl.BlockSpec((1, tn), lambda i, j, k: (0, j)),
        ],
        out_specs=pl.BlockSpec((tm, tn), lambda i, j, k: (i, j)),
        scratch_shapes=[pltpu.VMEM((tm, tn), jnp.float32)],
        compiler_params=_cparams(("parallel", "parallel", "arbitrary")),
    )(x2d, w, b)


# -------------- flash-style multi-head self-attention (online softmax) --------------

def _mhsa_flash_kernel(qkv_q_ref, qkv_kv_ref, mask_ref, o_ref,
                       m_sc, l_sc, acc_sc, *, num_heads):
    ki = pl.program_id(2)

    @pl.when(ki == 0)
    def _():
        m_sc[...] = jnp.full_like(m_sc, -jnp.inf)
        l_sc[...] = jnp.zeros_like(l_sc)
        acc_sc[...] = jnp.zeros_like(acc_sc)

    D = o_ref.shape[-1]
    dk = D // num_heads
    # additive key-padding bias built in-kernel from the compact (1, tkv) mask
    bias = jnp.where(mask_ref[0] == 0.0, NEG_INF, 0.0)            # (1, tkv) f32

    # Static unroll over heads: with flash tiling the per-head live values are
    # only (tq, tkv) tiles, so live ranges stay bounded even for larger H.
    # TODO(synk): pack two heads into a block-diagonal 128-wide contraction to
    # raise MXU utilization of QK^T on 256-wide MXUs (v6e/v7x).
    for h in range(num_heads):
        # 1/sqrt(dk) is folded into the Q weights at init time; qkv is bf16.
        q = qkv_q_ref[0, :, h * dk:(h + 1) * dk]
        k = qkv_kv_ref[0, :, D + h * dk:D + (h + 1) * dk]
        v = qkv_kv_ref[0, :, 2 * D + h * dk:2 * D + (h + 1) * dk]
        # contract dk on both operands: no in-kernel transpose of K
        s = lax.dot_general(q, k, (((1,), (1,)), ((), ())),
                            preferred_element_type=jnp.float32)   # (tq, tkv)
        s = s + bias
        m_prev = m_sc[:, h:h + 1]
        m_new = jnp.maximum(m_prev, jnp.max(s, axis=-1, keepdims=True))
        a = jnp.exp(m_prev - m_new)
        # exp kept in f32 for portability (v5e has no bf16 EUP); on v6e/v7x a
        # bf16 exp here roughly doubles EUP throughput.
        p = jnp.exp(s - m_new)
        l_sc[:, h:h + 1] = a * l_sc[:, h:h + 1] + jnp.sum(p, axis=-1, keepdims=True)
        acc_sc[:, h * dk:(h + 1) * dk] = (
            a * acc_sc[:, h * dk:(h + 1) * dk]
            + jnp.dot(p.astype(jnp.bfloat16), v, preferred_element_type=jnp.float32))
        m_sc[:, h:h + 1] = m_new

    @pl.when(ki == pl.num_programs(2) - 1)
    def _():
        parts = []
        for h in range(num_heads):
            inv = pl.reciprocal(l_sc[:, h:h + 1], approx=True)
            parts.append(acc_sc[:, h * dk:(h + 1) * dk] * inv)
        # single lane-dense (tq, D) store instead of H masked dk-wide stores
        o_ref[0] = jnp.concatenate(parts, axis=-1).astype(o_ref.dtype)


def mhsa(qkv, key_mask, num_heads, *, tq=256, tkv=512, out_dtype=jnp.bfloat16):
    # qkv: (B, S, 3D) bf16 [fused Q|K|V], key_mask: (B, S) (nonzero = attend)
    B, S, D3 = qkv.shape
    D = D3 // 3
    tq, tkv = _tile(S, tq), _tile(S, tkv)
    assert S % tq == 0 and S % tkv == 0, "query/kv tiles must divide S"
    mask3 = key_mask.reshape(B, 1, S).astype(jnp.float32)
    return pl.pallas_call(
        functools.partial(_mhsa_flash_kernel, num_heads=num_heads),
        out_shape=jax.ShapeDtypeStruct((B, S, D), out_dtype),
        grid=(B, S // tq, S // tkv),
        in_specs=[
            pl.BlockSpec((1, tq, D3), lambda b, qi, ki: (b, qi, 0)),   # Q view
            pl.BlockSpec((1, tkv, D3), lambda b, qi, ki: (b, ki, 0)),  # K/V view
            pl.BlockSpec((1, 1, tkv), lambda b, qi, ki: (b, 0, ki)),   # padding mask
        ],
        out_specs=pl.BlockSpec((1, tq, D), lambda b, qi, ki: (b, qi, 0)),
        scratch_shapes=[
            pltpu.VMEM((tq, num_heads), jnp.float32),   # running max per head
            pltpu.VMEM((tq, num_heads), jnp.float32),   # running sum per head
            pltpu.VMEM((tq, D), jnp.float32),           # running PV accumulator
        ],
        compiler_params=_cparams(("parallel", "parallel", "arbitrary")),
    )(qkv, qkv, mask3)


# ------------- output projection fused with residual add + LayerNorm -------------

def _matmul_res_ln_kernel(x_ref, w_ref, b_ref, res_ref, alpha_ref, beta_ref,
                          o_ref, acc_ref):
    k = pl.program_id(1)

    @pl.when(k == 0)
    def _():
        acc_ref[...] = jnp.zeros_like(acc_ref)

    acc_ref[...] += jnp.dot(x_ref[...].astype(jnp.bfloat16), w_ref[...],
                            preferred_element_type=jnp.float32)

    @pl.when(k == pl.num_programs(1) - 1)
    def _():
        z = acc_ref[...] + b_ref[...] + res_ref[...]
        o_ref[...] = _layernorm_rows(z, alpha_ref[0], beta_ref[0])


def matmul_res_ln(x2d, w, b, res2d, alpha, beta, *, tm=256, tk=512):
    # LN(res + x @ w + b); x2d: (M, K) bf16, w: (K, D) bf16, res2d: (M, D) f32
    # NOTE(v7x): with very large D drop tm to 128 (full-D res/out/acc blocks).
    M, K = x2d.shape
    D = w.shape[1]
    tm, tk = _tile(M, tm), _tile(K, tk)
    assert M % tm == 0 and K % tk == 0, "tiles must divide dims"
    return pl.pallas_call(
        _matmul_res_ln_kernel,
        out_shape=jax.ShapeDtypeStruct((M, D), jnp.float32),
        grid=(M // tm, K // tk),
        in_specs=[
            pl.BlockSpec((tm, tk), lambda i, k: (i, k)),
            pl.BlockSpec((tk, D), lambda i, k: (k, 0)),
            pl.BlockSpec((1, D), lambda i, k: (0, 0)),
            pl.BlockSpec((tm, D), lambda i, k: (i, 0)),
            pl.BlockSpec(memory_space=pltpu.MemorySpace.SMEM),
            pl.BlockSpec(memory_space=pltpu.MemorySpace.SMEM),
        ],
        out_specs=pl.BlockSpec((tm, D), lambda i, k: (i, 0)),
        scratch_shapes=[pltpu.VMEM((tm, D), jnp.float32)],
        compiler_params=_cparams(("parallel", "arbitrary")),
    )(x2d, w, b, res2d, alpha, beta)


# ---------------- FFN (Linear->ReLU->Linear) fused with residual + LN ----------------

def _ffn_res_ln_kernel(x_ref, w1_ref, b1_ref, w2_ref, b2_ref, alpha_ref,
                       beta_ref, o_ref, acc_ref, xb_ref):
    f = pl.program_id(1)

    @pl.when(f == 0)
    def _():
        acc_ref[...] = jnp.zeros_like(acc_ref)
        xb_ref[...] = x_ref[...].astype(jnp.bfloat16)   # cast once per row tile

    h = jnp.dot(xb_ref[...], w1_ref[...],
                preferred_element_type=jnp.float32) + b1_ref[...]
    h = jnp.maximum(h, 0.0)
    acc_ref[...] += jnp.dot(h.astype(jnp.bfloat16), w2_ref[...],
                            preferred_element_type=jnp.float32)

    @pl.when(f == pl.num_programs(1) - 1)
    def _():
        z = acc_ref[...] + b2_ref[...] + x_ref[...]
        o_ref[...] = _layernorm_rows(z, alpha_ref[0], beta_ref[0])


def ffn_res_ln(x2d, w1, b1, w2, b2, alpha, beta, *, tm=256, tf=512):
    # LN(x + relu(x @ w1 + b1) @ w2 + b2); tiled over rows and d_ff
    M, D = x2d.shape
    d_ff = w1.shape[1]
    tm, tf = _tile(M, tm), _tile(d_ff, tf)
    assert M % tm == 0 and d_ff % tf == 0, "tiles must divide dims"
    return pl.pallas_call(
        _ffn_res_ln_kernel,
        out_shape=jax.ShapeDtypeStruct((M, D), jnp.float32),
        grid=(M // tm, d_ff // tf),
        in_specs=[
            pl.BlockSpec((tm, D), lambda i, f: (i, 0)),
            pl.BlockSpec((D, tf), lambda i, f: (0, f)),
            pl.BlockSpec((1, tf), lambda i, f: (0, f)),
            pl.BlockSpec((tf, D), lambda i, f: (f, 0)),
            pl.BlockSpec((1, D), lambda i, f: (0, 0)),
            pl.BlockSpec(memory_space=pltpu.MemorySpace.SMEM),
            pl.BlockSpec(memory_space=pltpu.MemorySpace.SMEM),
        ],
        out_specs=pl.BlockSpec((tm, D), lambda i, f: (i, 0)),
        scratch_shapes=[pltpu.VMEM((tm, D), jnp.float32),
                        pltpu.VMEM((tm, D), jnp.bfloat16)],
        compiler_params=_cparams(("parallel", "arbitrary")),
    )(x2d, w1, b1, w2, b2, alpha, beta)


# ----------------------------- final LayerNormalization -----------------------------

def _ln_kernel(x_ref, alpha_ref, beta_ref, o_ref):
    o_ref[...] = _layernorm_rows(x_ref[...], alpha_ref[0], beta_ref[0])


def layer_norm(x2d, alpha, beta, *, tm=512):
    M, D = x2d.shape
    tm = _tile(M, tm)
    assert M % tm == 0, "row tile must divide M"
    return pl.pallas_call(
        _ln_kernel,
        out_shape=jax.ShapeDtypeStruct((M, D), jnp.float32),
        grid=(M // tm,),
        in_specs=[
            pl.BlockSpec((tm, D), lambda i: (i, 0)),
            pl.BlockSpec(memory_space=pltpu.MemorySpace.SMEM),
            pl.BlockSpec(memory_space=pltpu.MemorySpace.SMEM),
        ],
        out_specs=pl.BlockSpec((tm, D), lambda i: (i, 0)),
        compiler_params=_cparams(("parallel",)),
    )(x2d, alpha, beta)


# ------------------------------------ glue (JAX) ------------------------------------

def encoder_block(x, key_mask, p, num_heads):
    B, S, D = x.shape
    M = B * S
    x2d = x.reshape(M, D)
    # fused Q|K|V projection (bf16 output: its consumer feeds the MXU in bf16)
    qkv = linear(x2d, p["w_qkv"], p["b_qkv"]).reshape(B, S, 3 * D)
    # flash-style multi-head self-attention, lane-dense bf16 (B, S, D) output
    attn = mhsa(qkv, key_mask, num_heads)
    # output projection fused with residual add + LayerNorm (post-norm block)
    y2d = matmul_res_ln(attn.reshape(M, D), p["wo"], p["bo"], x2d,
                        p["ln0_alpha"], p["ln0_beta"])
    # feed-forward fused with residual add + LayerNorm
    z2d = ffn_res_ln(y2d, p["ffn_w1"], p["ffn_b1"], p["ffn_w2"], p["ffn_b2"],
                     p["ln1_alpha"], p["ln1_beta"])
    return z2d.reshape(B, S, D)


def encoder_forward(x, key_mask, params, num_heads):
    # key_mask: compact (B, S) padding mask (nonzero = attend). The -1e9
    # additive bias is built inside the attention kernel — no (B,1,S,S) in HBM.
    B, S, D = x.shape
    # Faithful to the reference Encoder.forward: `return` is inside the layer
    # loop, so only the FIRST layer runs before the final LayerNormalization.
    for layer_p in params["layers"]:
        x = encoder_block(x, key_mask, layer_p, num_heads)
        return layer_norm(x.reshape(B * S, D), params["norm_alpha"],
                          params["norm_beta"]).reshape(B, S, D)
    return None


def init_params(key, d_model, d_ff, num_layers, num_heads):
    keys = jax.random.split(key, num_layers)
    dk = d_model // num_heads
    scale = 1.0 / (dk ** 0.5)

    def layer_params(k):
        kq, kk, kv, ko, k1, k2 = jax.random.split(k, 6)
        s = 0.02
        # fold the attention scale 1/sqrt(dk) into the Q projection weights
        # (and it would also apply to the Q bias, which is zero here)
        wq = jax.random.normal(kq, (d_model, d_model), jnp.float32) * s * scale
        wk = jax.random.normal(kk, (d_model, d_model), jnp.float32) * s
        wv = jax.random.normal(kv, (d_model, d_model), jnp.float32) * s
        return {
            # matmul weights stored bf16 (MXU inputs); biases / LN params stay f32
            "w_qkv": jnp.concatenate([wq, wk, wv], axis=1).astype(jnp.bfloat16),
            "b_qkv": jnp.zeros((1, 3 * d_model), jnp.float32),
            "wo": (jax.random.normal(ko, (d_model, d_model), jnp.float32) * s
                   ).astype(jnp.bfloat16),
            "bo": jnp.zeros((1, d_model), jnp.float32),
            "ffn_w1": (jax.random.normal(k1, (d_model, d_ff), jnp.float32) * s
                       ).astype(jnp.bfloat16),
            "ffn_b1": jnp.zeros((1, d_ff), jnp.float32),
            "ffn_w2": (jax.random.normal(k2, (d_ff, d_model), jnp.float32) * s
                       ).astype(jnp.bfloat16),
            "ffn_b2": jnp.zeros((1, d_model), jnp.float32),
            "ln0_alpha": jnp.ones((1,), jnp.float32),
            "ln0_beta": jnp.zeros((1,), jnp.float32),
            "ln1_alpha": jnp.ones((1,), jnp.float32),
            "ln1_beta": jnp.zeros((1,), jnp.float32),
        }

    return {
        "layers": [layer_params(keys[i]) for i in range(num_layers)],
        # final LayerNormalization of the Encoder (alpha=1, bias=0 as in __init__)
        "norm_alpha": jnp.ones((1,), jnp.float32),
        "norm_beta": jnp.zeros((1,), jnp.float32),
    }


if __name__ == "__main__":
    B, S, D, H, D_FF, N_LAYERS = 2, 8, 32, 4, 64, 2

    key = jax.random.PRNGKey(0)
    kx, kp = jax.random.split(key, 2)

    x = jax.random.normal(kx, (B, S, D), jnp.float32)
    # compact key-padding mask (nonzero = attend); all positions valid here
    key_mask = jnp.ones((B, S), jnp.float32)

    params = init_params(kp, D, D_FF, N_LAYERS, H)

    out = encoder_forward(x, key_mask, params, H)
    jax.block_until_ready(out)
    assert out.shape == (B, S, D)
    assert bool(jnp.all(jnp.isfinite(out)))
    print("KERNEL_OK")
</pallas_src>

<mosaic_0001>
module attributes {stable_mosaic.version = 11 : i64} {
  func.func @_linear_kernel(%arg0: i32, %arg1: i32, %arg2: i32, %arg3: memref<16x32xf32, #tpu.memory_space<vmem>>, %arg4: memref<32x96xbf16, #tpu.memory_space<vmem>>, %arg5: memref<1x96xf32, #tpu.memory_space<vmem>>, %arg6: memref<16x96xbf16, #tpu.memory_space<vmem>>, %arg7: memref<16x96xf32, #tpu.memory_space<vmem>>) attributes {dimension_semantics = [#tpu.dimension_semantics<parallel>, #tpu.dimension_semantics<parallel>, #tpu.dimension_semantics<arbitrary>], iteration_bounds = array<i64: 1, 1, 1>, scalar_prefetch = 0 : i64, scratch_operands = 1 : i64, tpu.core_type = #tpu.core_type<tc>, window_params = [{transform_indices = @transform_0, window_bounds = array<i64: 16, 32>}, {transform_indices = @transform_1, window_bounds = array<i64: 32, 96>}, {transform_indices = @transform_2, window_bounds = array<i64: 1, 96>}, {transform_indices = @transform_3, window_bounds = array<i64: 16, 96>}]} {
    %c0_i32 = arith.constant 0 : i32
    %0 = arith.cmpi eq, %arg2, %c0_i32 : i32
    %1 = arith.extui %0 : i1 to i32
    %c0_i32_0 = arith.constant 0 : i32
    %2 = arith.cmpi ne, %1, %c0_i32_0 : i32
    scf.if %2 {
      %cst_10 = arith.constant 0.000000e+00 : f32
      %13 = vector.broadcast %cst_10 : f32 to vector<16x96xf32>
      %c0_11 = arith.constant 0 : index
      %c0_12 = arith.constant 0 : index
      %14 = vector.load %arg7[%c0_11, %c0_12] : memref<16x96xf32, #tpu.memory_space<vmem>>, vector<16x96xf32>
      tpu.vector_store %arg7[%c0_11, %c0_12], %13 {strides = array<i32>} : memref<16x96xf32, #tpu.memory_space<vmem>>, vector<16x96xf32>,
    } else {
    }
    %c0 = arith.constant 0 : index
    %c0_1 = arith.constant 0 : index
    %3 = vector.load %arg7[%c0, %c0_1] : memref<16x96xf32, #tpu.memory_space<vmem>>, vector<16x96xf32>
    %c0_2 = arith.constant 0 : index
    %c0_3 = arith.constant 0 : index
    %4 = vector.load %arg3[%c0_2, %c0_3] : memref<16x32xf32, #tpu.memory_space<vmem>>, vector<16x32xf32>
    %5 = arith.truncf %4 : vector<16x32xf32> to vector<16x32xbf16>
    %c0_4 = arith.constant 0 : index
    %c0_5 = arith.constant 0 : index
    %6 = vector.load %arg4[%c0_4, %c0_5] : memref<32x96xbf16, #tpu.memory_space<vmem>>, vector<32x96xbf16>
    %cst = arith.constant dense<0.000000e+00> : vector<16x96xf32>
    %7 = tpu.matmul %5, %6, %cst {dimension_numbers = #tpu.dot_dimension_numbers<[1], [0], [0], [1], [0, 0, 1, 1], [], []>} : vector<16x32xbf16>, vector<32x96xbf16>, vector<16x96xf32> -> vector<16x96xf32>
    %8 = arith.addf %3, %7 : vector<16x96xf32>
    %c0_6 = arith.constant 0 : index
    %c0_7 = arith.constant 0 : index
    %9 = vector.load %arg7[%c0_6, %c0_7] : memref<16x96xf32, #tpu.memory_space<vmem>>, vector<16x96xf32>
    tpu.vector_store %arg7[%c0_6, %c0_7], %8 {strides = array<i32>} : memref<16x96xf32, #tpu.memory_space<vmem>>, vector<16x96xf32>,
    %c0_i32_8 = arith.constant 0 : i32
    %10 = arith.cmpi eq, %arg2, %c0_i32_8 : i32
    %11 = arith.extui %10 : i1 to i32
    %c0_i32_9 = arith.constant 0 : i32
    %12 = arith.cmpi ne, %11, %c0_i32_9 : i32
    scf.if %12 {
      %c0_10 = arith.constant 0 : index
      %c0_11 = arith.constant 0 : index
      %13 = vector.load %arg7[%c0_10, %c0_11] : memref<16x96xf32, #tpu.memory_space<vmem>>, vector<16x96xf32>
      %c0_12 = arith.constant 0 : index
      %c0_13 = arith.constant 0 : index
      %14 = vector.load %arg5[%c0_12, %c0_13] : memref<1x96xf32, #tpu.memory_space<vmem>>, vector<1x96xf32>
      %15 = vector.broadcast %14 : vector<1x96xf32> to vector<16x96xf32>
      %16 = arith.addf %13, %15 : vector<16x96xf32>
      %17 = arith.truncf %16 : vector<16x96xf32> to vector<16x96xbf16>
      %c0_14 = arith.constant 0 : index
      %c0_15 = arith.constant 0 : index
      %18 = vector.load %arg6[%c0_14, %c0_15] : memref<16x96xbf16, #tpu.memory_space<vmem>>, vector<16x96xbf16>
      tpu.vector_store %arg6[%c0_14, %c0_15], %17 {strides = array<i32>} : memref<16x96xbf16, #tpu.memory_space<vmem>>, vector<16x96xbf16>,
    } else {
    }
    return
  }
  func.func @transform_0(%arg0: i32, %arg1: i32, %arg2: i32) -> (i32, i32) {
    %c0_i32 = arith.constant 0 : i32
    return %arg0, %arg2 : i32, i32
  }
  func.func @transform_1(%arg0: i32, %arg1: i32, %arg2: i32) -> (i32, i32) {
    %c0_i32 = arith.constant 0 : i32
    return %arg2, %arg1 : i32, i32
  }
  func.func @transform_2(%arg0: i32, %arg1: i32, %arg2: i32) -> (i32, i32) {
    %c0_i32 = arith.constant 0 : i32
    %c0_i32_0 = arith.constant 0 : i32
    return %c0_i32, %arg1 : i32, i32
  }
  func.func @transform_3(%arg0: i32, %arg1: i32, %arg2: i32) -> (i32, i32) {
    %c0_i32 = arith.constant 0 : i32
    return %arg0, %arg1 : i32, i32
  }
}

</mosaic_0001>

<llo_original>
// kernel: tpu_custom_call.1
$region0: #{tpu_custom_call.1}
  #allocation0 [shape = 'u32[]', space=smem, size = 0x4, offset = 0x4, fixed_abs, tag = 'smem constant byte address 0x4 - core index']
  #allocation1 [shape = 'u32[144,128]{1,0:T(1,128)}', space=vmem, size = 0x12000, scoped, tag = 'internal scratch']
  #allocation2 [shape = 'f32[16,96]{1,0:T(8,128)}', space=vmem, size = 0x2000, scoped, tag = 'scratch operand']
  %s0 = inlined_call_operand.hbm [shape: f32[16,32], index: 0, kind: input, shape index: {}]
  %s1 = inlined_call_operand.hbm [shape: bf16[32,96], index: 1, kind: input, shape index: {}]
  %s2 = inlined_call_operand.vmem [shape: f32[1,96], index: 2, kind: input, shape index: {}]
  %s3 = inlined_call_operand.hbm [shape: bf16[16,96], index: 3, kind: output, shape index: {}]
  %s4 = sld [smem:[#allocation0]]
  $region38: #{tpu_custom_call.1} parent=0
    _
  %s6 = ssub.s32 1, %s4
  %s7 = scalar_select 0, %s6, %s4
  $region1: #{tpu_custom_call.1} parent=0
    #allocation3 [shape = 'u8[8192]{0}', space=vmem, size = 0x2000, scoped, tag = 'input window, operand 0, single buffered']
    #allocation4 [shape = 's32[1]{0}', space=sflag, size = 0x4, scoped, tag = 'scoped memory for tpu_custom_call.1']
    #allocation5 [shape = 's32[1]{0}', space=sflag, size = 0x4, scoped, tag = 'scoped memory for tpu_custom_call.1']
    #allocation6 [shape = 'u8[8192]{0}', space=vmem, size = 0x2000, scoped, tag = 'input window, operand 1, single buffered']
    #allocation7 [shape = 's32[1]{0}', space=sflag, size = 0x4, scoped, tag = 'scoped memory for tpu_custom_call.1']
    #allocation8 [shape = 'u8[4096]{0}', space=vmem, size = 0x1000, scoped, tag = 'output window, operand 0, single buffered']
    %8 = vsyncpa [#allocation4], 0
    %9 = vsyncpa [#allocation7], 0
    %10 = vsyncpa [#allocation5], 0
    // Predicated region
    $region2: #{tpu_custom_call.1} parent=1 // pred_check
      _
    $region3: #{tpu_custom_call.1} parent=1 // pred_check_branch
      %12 = sbr.rel (0) target = $region5
    $region4: #{tpu_custom_call.1} parent=1 // pred_region
      %s14 = ssub.s32 256, 256
      %15 = vsyncadd [#allocation4], %s14
      %s16 = sshll.u32 [#allocation3], 4
      %s17 = int_to_ptr.vmem [resolvable:$true] %s16
      %22 = dma.hbm_to_vmem [thread:$0]  %s0, 256, %s17, [#allocation4], 128, 128, 8
    $region5: #{tpu_custom_call.1} parent=1 // pred_fallthru
      _
    // Predicated region
    $region6: #{tpu_custom_call.1} parent=1 // pred_check
      _
    $region7: #{tpu_custom_call.1} parent=1 // pred_check_branch
      %24 = sbr.rel (0) target = $region9
    $region8: #{tpu_custom_call.1} parent=1 // pred_region
      %s26 = ssub.s32 256, 256
      %27 = vsyncadd [#allocation7], %s26
      %s28 = sshll.u32 [#allocation6], 4
      %s29 = int_to_ptr.vmem [resolvable:$true] %s28
      %34 = dma.hbm_to_vmem [thread:$0]  %s1, 256, %s29, [#allocation7], 64, 64, 4
    $region9: #{tpu_custom_call.1} parent=1 // pred_fallthru
      _
    // Predicated region
    $region10: #{tpu_custom_call.1} parent=1 // pred_check
      _
    $region11: #{tpu_custom_call.1} parent=1 // pred_check_branch
      %36 = sbr.rel (0) target = $region13
    $region12: #{tpu_custom_call.1} parent=1 // pred_region
      _
    $region13: #{tpu_custom_call.1} parent=1 // pred_fallthru
      _
    // Predicated region
    $region14: #{tpu_custom_call.1} parent=1 // pred_check
      _
    $region15: #{tpu_custom_call.1} parent=1 // pred_check_branch
      %38 = sbr.rel (0) target = $region17
    $region16: #{tpu_custom_call.1} parent=1 // pred_region
      %39 = dma.done [#allocation4], 256
    $region17: #{tpu_custom_call.1} parent=1 // pred_fallthru
      _
    // Predicated region
    $region18: #{tpu_custom_call.1} parent=1 // pred_check
      _
    $region19: #{tpu_custom_call.1} parent=1 // pred_check_branch
      %41 = sbr.rel (0) target = $region21
    $region20: #{tpu_custom_call.1} parent=1 // pred_region
      %42 = dma.done [#allocation7], 256
    $region21: #{tpu_custom_call.1} parent=1 // pred_fallthru
      _
    %p44 = scmp.eq.s32.totalorder 0, 0
    // Predicated region
    $region22: #{tpu_custom_call.1} parent=1 // pred_check
      %p45 = pneg %p44
    $region23: #{tpu_custom_call.1} parent=1 // pred_check_branch
      %47 = sbr.rel (%p45) target = $region25
    $region24: #{tpu_custom_call.1} parent=1 // pred_region
      %vm48 = vcmask 785408
      %49 = vst.msk [vmem:[#allocation2] sm:$0xff] %vm48, 0.0
      %50 = vst.msk [vmem:[#allocation2 + $0x8] sm:$0xff] %vm48, 0.0
    $region25: #{tpu_custom_call.1} parent=1 // pred_fallthru
      _
    %v51 = vld [vmem:[#allocation2] sm:$0xff]
    %v52 = vld [vmem:[#allocation2 + $0x8] sm:$0xff]
    %v53 = vld [vmem:[#allocation3] sm:$0xff]
    %v54 = vld [vmem:[#allocation3 + $0x8] sm:$0xff]
    %v55 = vpack.c.bf16 %v54, %v53
    %v56 = vld [vmem:[#allocation6] sm:$0xf]
    %v57 = vld [vmem:[#allocation6 + $0x4] sm:$0xf]
    %v58 = vld [vmem:[#allocation6 + $0x8] sm:$0xf]
    %v59 = vld [vmem:[#allocation6 + $0xc] sm:$0xf]
    %v64 = vunpack.c.l.b16 %v56
    %v65 = vunpack.c.l.b16 %v57
    %v66 = vunpack.c.l.b16 %v58
    %v67 = vunpack.c.l.b16 %v59
    %v68 = vpack.c.b16 %v65, %v64
    %v69 = vpack.c.b16 %v67, %v66
    %vm72 = vcmask 261120
    %v74 = vsel %vm72, %v55, 0
    %76 = vmatprep.subr.bf16.mxu0 0
    %77 = vmatpush1.bf16.msra.mxu0 %v68
    %78 = vmatprep.subr.bf16.mxu0 0
    %79 = vmatpush1.bf16.msra.mxu0 %v69
    %80 = vmatprep.subr.bf16.mxu0 0
    %81 = vmatpush1.bf16.msra.mxu0 0
    %82 = vmatprep.subr.bf16.mxu0 0
    %83 = vmatpush1.bf16.msra.mxu0 0
    %84 = vmatprep.subr.bf16.mxu0 0
    %85 = vmatpush1.bf16.msra.mxu0 0
    %86 = vmatprep.subr.bf16.mxu0 0
    %87 = vmatpush1.bf16.msra.mxu0 0
    %88 = vmatprep.subr.bf16.mxu0 0
    %89 = vmatpush1.bf16.msra.mxu0 0
    %90 = vmatprep.subr.bf16.mxu0 0
    %91 = vmatpush1.bf16.msra.mxu0 0
    %92 = vmatprep.subr.bf16.mxu0 0
    %93 = vmatpush1.bf16.msra.mxu0 0
    %94 = vmatprep.subr.bf16.mxu0 0
    %95 = vmatpush1.bf16.msra.mxu0 0
    %96 = vmatprep.subr.bf16.mxu0 0
    %97 = vmatpush1.bf16.msra.mxu0 0
    %98 = vmatprep.subr.bf16.mxu0 0
    %99 = vmatpush1.bf16.msra.mxu0 0
    %100 = vmatprep.subr.bf16.mxu0 0
    %101 = vmatpush1.bf16.msra.mxu0 0
    %102 = vmatprep.subr.bf16.mxu0 0
    %103 = vmatpush1.bf16.msra.mxu0 0
    %104 = vmatprep.subr.bf16.mxu0 0
    %105 = vmatpush1.bf16.msra.mxu0 0
    %106 = vmatprep.subr.bf16.mxu0 0
    %107 = vmatpush1.bf16.msra.mxu0 0
    %108 = vmatprep.mubr.bf16.mxu0 0
    %109 = vmatmul.mubr.bf16.gmra.mrb[0].mxu0 %v74
    %v110 = vpop.f32.mrb[0].mxu0
    %v111 = vadd.f32 0.0, %v110
    %v112 = vpop.f32.mrb[0].mxu0
    %v113 = vpop.f32.mrb[0].mxu0
    %v114 = vadd.f32 0.0, %v113
    %v115 = vpop.f32.mrb[0].mxu0
    %116 = vdwg.mxu0
    %v117 = vadd.f32 %v51, %v111
    %v118 = vadd.f32 %v52, %v114
    %vm119 = vcmask 785408
    %120 = vst.msk [vmem:[#allocation2] sm:$0xff] %vm119, %v117
    %121 = vst.msk [vmem:[#allocation2 + $0x8] sm:$0xff] %vm119, %v118
    // Predicated region
    $region26: #{tpu_custom_call.1} parent=1 // pred_check
      %p122 = pneg %p44
    $region27: #{tpu_custom_call.1} parent=1 // pred_check_branch
      %124 = sbr.rel (%p122) target = $region29
    $region28: #{tpu_custom_call.1} parent=1 // pred_region
      %v125 = vld [vmem:[#allocation2] sm:$0xff]
      %v126 = vld [vmem:[#allocation2 + $0x8] sm:$0xff]
      %v127 = vld [vmem:[%s2] sm:$0x1]
      %v129 = vlaneseq
      %v130 = vshrl.u32 %v129, 7
      %v131 = vsub.s32 0, %v130
      %v132 = vrot.slane %v127, %v131
      %v134 = vadd.f32 %v125, %v132
      %v135 = vadd.f32 %v126, %v132
      %v136 = vpack.c.bf16 %v135, %v134
      %v138 = vunpack.c.l.b16 %v136
      %v139 = vunpack.c.h.b16 %v136
      %v140 = vpack.c.b16 %v138, %v138
      %v141 = vpack.c.b16 %v139, %v139
      %vm144 = vcmask 781312
      %145 = vst.msk [vmem:[#allocation8] sm:$0xf] %vm144, %v140
      %146 = vst.msk [vmem:[#allocation8 + $0x4] sm:$0xf] %vm144, %v141
    $region29: #{tpu_custom_call.1} parent=1 // pred_fallthru
      _
    // Predicated region
    $region30: #{tpu_custom_call.1} parent=1 // pred_check
      _
    $region31: #{tpu_custom_call.1} parent=1 // pred_check_branch
      %148 = sbr.rel (0) target = $region33
    $region32: #{tpu_custom_call.1} parent=1 // pred_region
      %s150 = ssub.s32 128, 128
      %151 = vsyncadd [#allocation5], %s150
      %s152 = sshll.u32 [#allocation8], 4
      %s153 = int_to_ptr.vmem [resolvable:$true] %s152
      %158 = dma.vmem_to_hbm [thread:$0]  %s153, 128, %s3, [#allocation5], 64, 64, 4
    $region33: #{tpu_custom_call.1} parent=1 // pred_fallthru
      _
    // Predicated region
    $region34: #{tpu_custom_call.1} parent=1 // pred_check
      _
    $region35: #{tpu_custom_call.1} parent=1 // pred_check_branch
      %160 = sbr.rel (0) target = $region37
    $region36: #{tpu_custom_call.1} parent=1 // pred_region
      %161 = dma.done [#allocation5], 128
    $region37: #{tpu_custom_call.1} parent=1 // pred_fallthru
      _
    %162 = vsyncpa [#allocation4], 1
    %163 = vsyncpa [#allocation7], 1
    %164 = vsyncpa [#allocation5], 1

</llo_original>
